<compile_context>
chip_gen: v7x
topology: tpu7x:2x2x1
jax: 0.10.0
libtpu: 0.0.40
codegen_flags: <defaults>
</compile_context>

<pallas_src>
import functools
import math

import jax
import jax.numpy as jnp
import numpy as np
from jax import lax
from jax.experimental import pallas as pl
from jax.experimental.pallas import tpu as pltpu

PADDING_IDX = 0
CE_WEIGHT = 0.7   # unused in forward (matches the PyTorch module)
SEQ_WEIGHT = 0.3
SMOOTHING = 0.05


def _vmem_capacity_bytes():
    """Best-effort physical VMEM query; conservative (v7x) fallback."""
    try:
        info = pltpu.get_tpu_info()
        for name in ("vmem_capacity_bytes", "vmem_size_bytes", "vmem_bytes"):
            v = getattr(info, name, None)
            if v:
                return int(v)
    except Exception:
        pass
    return 64 * 1024 * 1024


def _seq_acc_loss_kernel(logits_ref, tgt_ref, loss_ref, corr_ref, mask_ref,
                         loss_acc, corr_acc, mask_acc, *,
                         tiles_per_split, seq_len, padding_idx,
                         w_tgt, w_off, c_plogp, vocab):
    p = pl.program_id(0)          # sequence-split (v7x dual-core) axis
    t = pl.program_id(2)          # sequence-tile (reduction) axis
    num_t = pl.num_programs(2)

    @pl.when(t == 0)
    def _init():
        loss_acc[...] = jnp.zeros_like(loss_acc)
        corr_acc[...] = jnp.zeros_like(corr_acc)
        mask_acc[...] = jnp.zeros_like(mask_acc)

    # Cast to f32 *inside* the kernel (keeps HBM traffic at native width;
    # v5e has no bf16 VPU/EUP).
    logits = logits_ref[0].astype(jnp.float32)       # (tS, V)
    tgt = tgt_ref[0]                                  # (tS, 1) int32
    tS, V = logits.shape

    # Global-row validity handles the ragged last S tile with NO host-side pad
    # of the logits tensor.  Must be combined through jnp.where (not multiply)
    # so garbage rows never leak NaN/Inf into the accumulators.
    row0 = (p * tiles_per_split + t) * tS
    row_ids = row0 + lax.broadcasted_iota(jnp.int32, (tS, 1), 0)
    in_range = row_ids < seq_len                      # (tS, 1) bool

    valid = jnp.logical_and(in_range, tgt != padding_idx)
    mask = valid.astype(jnp.float32)                  # (tS, 1)
    tgt_np = jnp.where(valid, tgt, 0)                 # pad / OOB rows -> class 0

    # log-softmax pieces (single streaming pass over the (tS, V) tile).
    rowmax = jnp.max(logits, axis=1, keepdims=True)               # (tS, 1)
    z = logits - rowmax                                           # (tS, V)
    lse = jnp.log(jnp.sum(jnp.exp(z), axis=1, keepdims=True))     # (tS, 1)

    col = lax.broadcasted_iota(jnp.int32, (tS, V), 1)
    sel = col == tgt_np
    z_tgt = jnp.sum(jnp.where(sel, z, 0.0), axis=1, keepdims=True)
    logp_tgt = z_tgt - lse

    # KL(smooth_targets || softmax(logits)) summed over vocab, per row:
    #   = C - [w_tgt * logp[tgt] + w_off * sum_v logp]
    if w_off != 0.0:
        sum_z = jnp.sum(z, axis=1, keepdims=True)
        plogq = w_tgt * logp_tgt + w_off * (sum_z - vocab * lse)
    else:  # smoothing == 0: compile out the extra cross-lane reduction
        plogq = w_tgt * logp_tgt
    token_loss = jnp.where(valid, c_plogp - plogq, 0.0)           # (tS, 1)

    # First-index argmax (matches torch.max tie-breaking): smallest column
    # whose shifted logit equals the row max (z == 0 exactly at the max).
    first_max = jnp.min(jnp.where(z == 0.0, col, V), axis=1, keepdims=True)
    token_correct = jnp.logical_and(valid, first_max == tgt_np).astype(jnp.float32)

    # Per-row VMEM accumulators (VPU adds); scalarize only at finalize.
    loss_acc[...] += token_loss
    corr_acc[...] += token_correct
    mask_acc[...] += mask

    @pl.when(t == num_t - 1)
    def _finalize():
        loss_ref[...] = jnp.broadcast_to(
            jnp.sum(loss_acc[...], keepdims=True), loss_ref.shape)
        corr_ref[...] = jnp.broadcast_to(
            jnp.sum(corr_acc[...], keepdims=True), corr_ref.shape)
        mask_ref[...] = jnp.broadcast_to(
            jnp.sum(mask_acc[...], keepdims=True), mask_ref.shape)


def sequence_accuracy_loss(outputs, targets, *, padding_idx=PADDING_IDX,
                           seq_weight=SEQ_WEIGHT, smoothing=SMOOTHING,
                           block_rows=None):
    """outputs: [B, S, V] logits (any float dtype); targets: [B, S] int ids.

    Returns (mean combined loss, mean exact-sequence accuracy) as f32 scalars.
    """
    B, S, V = outputs.shape
    tgt3 = targets.astype(jnp.int32).reshape(B, S, 1)

    # ---- per-generation tile sizing -------------------------------------
    vmem_cap = _vmem_capacity_bytes()
    vmem_limit = int(min(vmem_cap * 3 // 4, 112 * 1024 * 1024))
    in_itemsize = jnp.dtype(outputs.dtype).itemsize
    # Live set per sequence row: 2 double-buffered native-width input copies
    # plus ~6 f32 (tS, V) in-kernel temporaries (cast, z, exp, iota, select,
    # partials).  Sized so v7x's 64 MiB VMEM never spills; v5e/v6e get the
    # full benefit of their 128 MiB via larger tiles.
    row_bytes = V * (2 * in_itemsize + 6 * 4)
    tile_budget = (vmem_limit * 6) // 10
    cap_rows = int(max(8, min(2048, (tile_budget // row_bytes) // 8 * 8)))
    if block_rows is not None:
        cap_rows = min(cap_rows, max(8, (int(block_rows) // 8) * 8))

    if S <= cap_rows:
        tS, num_tiles = S, 1
    else:
        tS = cap_rows
        num_tiles = int(pl.cdiv(S, tS))

    # v7x has 2 TensorCores: if the batch axis alone cannot occupy both,
    # split the sequence-tile reduction across a leading parallel axis.
    P = 2 if (B == 1 and num_tiles >= 2 and num_tiles % 2 == 0) else 1
    T = num_tiles // P

    # Only the tiny targets array is padded (logits are never padded/copied).
    S_pad = num_tiles * tS
    if S_pad != S:
        tgt3 = jnp.pad(tgt3, ((0, 0), (0, S_pad - S), (0, 0)),
                       constant_values=padding_idx)

    # ---- compile-time label-smoothing constants --------------------------
    sm = float(smoothing)
    if sm > 0.0:
        c_plogp = (1.0 - sm) * math.log(1.0 - sm) + sm * math.log(sm / (V - 1))
        w_off = sm / (V - 1)
    else:
        c_plogp, w_off = 0.0, 0.0
    w_tgt = (1.0 - sm) - w_off

    kernel = functools.partial(
        _seq_acc_loss_kernel,
        tiles_per_split=int(T),
        seq_len=int(S),
        padding_idx=int(padding_idx),
        w_tgt=float(w_tgt),
        w_off=float(w_off),
        c_plogp=float(c_plogp),
        vocab=float(V),
    )

    # Lane-dense (8,128) output tiles: unmasked stores, no (8,128)-rule issues.
    out_sds = jax.ShapeDtypeStruct((P, B, 8, 128), jnp.float32)
    out_spec = pl.BlockSpec((1, 1, 8, 128), lambda p, b, t: (p, b, 0, 0))

    loss_part, corr_part, mask_part = pl.pallas_call(
        kernel,
        out_shape=(out_sds, out_sds, out_sds),
        grid_spec=pltpu.PrefetchScalarGridSpec(
            num_scalar_prefetch=0,
            grid=(P, B, T),
            in_specs=[
                pl.BlockSpec((1, tS, V), lambda p, b, t: (b, p * T + t, 0)),
                pl.BlockSpec((1, tS, 1), lambda p, b, t: (b, p * T + t, 0)),
            ],
            out_specs=[out_spec, out_spec, out_spec],
            scratch_shapes=[pltpu.VMEM((tS, 1), jnp.float32)] * 3,
        ),
        compiler_params=pltpu.CompilerParams(
            dimension_semantics=("parallel", "parallel", "arbitrary"),
            vmem_limit_bytes=vmem_limit),
    )(outputs, tgt3)

    # ---- tiny jnp epilogue: combine splits, penalty, batch means ---------
    loss_sum = jnp.sum(loss_part[:, :, 0, 0], axis=0)    # (B,)
    corr_sum = jnp.sum(corr_part[:, :, 0, 0], axis=0)    # (B,)
    mask_sum = jnp.sum(mask_part[:, :, 0, 0], axis=0)    # (B,)

    slc = jnp.maximum(mask_sum, 1e-8)
    masked_token_loss = loss_sum / slc
    seq_correctness = corr_sum / slc
    # All-padding sequence: 0 == 0 counts as "accurate" (matches PyTorch).
    seq_binary = (corr_sum == mask_sum).astype(jnp.float32)
    penalty = 1.0 + seq_weight * (1.0 - seq_correctness)
    combined = masked_token_loss * penalty
    return jnp.mean(combined), jnp.mean(seq_binary)


def _reference(outputs, targets, *, padding_idx=PADDING_IDX,
               seq_weight=SEQ_WEIGHT, smoothing=SMOOTHING):
    """Plain-JAX replica of the PyTorch forward, for correctness checking."""
    B, S, V = outputs.shape
    flat_out = outputs.reshape(-1, V).astype(jnp.float32)
    flat_tgt = targets.reshape(-1).astype(jnp.int32)

    mask_f = (flat_tgt != padding_idx).astype(jnp.float32)
    tgt_np = flat_tgt * (flat_tgt != padding_idx).astype(jnp.int32)
    one_hot = jax.nn.one_hot(tgt_np, V, dtype=jnp.float32)
    smooth_t = one_hot * (1.0 - smoothing) + (1.0 - one_hot) * smoothing / (V - 1)
    log_probs = jax.nn.log_softmax(flat_out, axis=1)
    kl = smooth_t * (jnp.log(smooth_t) - log_probs)
    token_loss = (kl.sum(axis=1) * mask_f).reshape(B, S)

    mask = (targets != padding_idx).astype(jnp.float32)
    pred = jnp.argmax(outputs.astype(jnp.float32), axis=-1)
    token_correct = (pred == targets).astype(jnp.float32) * mask
    seq_len = mask.sum(axis=1)
    sct = token_correct.sum(axis=1)
    slc = jnp.maximum(seq_len, 1e-8)
    seq_correctness = sct / slc
    seq_binary = (sct == seq_len).astype(jnp.float32)
    masked_token_loss = (token_loss * mask).sum(axis=1) / slc
    seq_penalty = 1.0 + seq_weight * (1.0 - seq_correctness)
    combined = masked_token_loss * seq_penalty
    return combined.mean(), seq_binary.mean()


if __name__ == "__main__":
    key = jax.random.PRNGKey(0)
    k1, k2, k3, k4, k5, k6 = jax.random.split(key, 6)

    # Case 1: small shapes, single S tile.
    B, S, V = 2, 8, 32
    outputs = jax.random.normal(k1, (B, S, V), dtype=jnp.float32)
    targets = jax.random.randint(k2, (B, S), minval=1, maxval=V, dtype=jnp.int32)
    targets = targets.at[:, -2:].set(PADDING_IDX)       # pad tail
    loss, acc = sequence_accuracy_loss(outputs, targets)
    loss, acc = jax.block_until_ready((loss, acc))
    ref_loss, ref_acc = _reference(outputs, targets)
    np.testing.assert_allclose(np.asarray(loss), np.asarray(ref_loss),
                               rtol=1e-5, atol=1e-5)
    np.testing.assert_allclose(np.asarray(acc), np.asarray(ref_acc),
                               rtol=1e-5, atol=1e-5)

    # Case 2: ragged S with in-kernel last-tile masking (S=20, tS=8 -> 3 tiles,
    # NO host pad of the logits tensor).
    B2, S2, V2 = 3, 20, 160
    out2 = jax.random.normal(k3, (B2, S2, V2), dtype=jnp.float32)
    tgt2 = jax.random.randint(k4, (B2, S2), minval=1, maxval=V2, dtype=jnp.int32)
    tgt2 = tgt2.at[:, -3:].set(PADDING_IDX)
    loss2, acc2 = sequence_accuracy_loss(out2, tgt2, block_rows=8)
    loss2, acc2 = jax.block_until_ready((loss2, acc2))
    rl2, ra2 = _reference(out2, tgt2)
    np.testing.assert_allclose(np.asarray(loss2), np.asarray(rl2),
                               rtol=1e-5, atol=1e-5)
    np.testing.assert_allclose(np.asarray(acc2), np.asarray(ra2),
                               rtol=1e-5, atol=1e-5)

    # Case 3: B == 1 -> sequence-split parallel axis (v7x dual-core path).
    B3, S3, V3 = 1, 32, 256
    out3 = jax.random.normal(k5, (B3, S3, V3), dtype=jnp.float32)
    tgt3i = jax.random.randint(k6, (B3, S3), minval=1, maxval=V3, dtype=jnp.int32)
    tgt3i = tgt3i.at[:, -4:].set(PADDING_IDX)
    loss3, acc3 = sequence_accuracy_loss(out3, tgt3i, block_rows=8)
    loss3, acc3 = jax.block_until_ready((loss3, acc3))
    rl3, ra3 = _reference(out3, tgt3i)
    np.testing.assert_allclose(np.asarray(loss3), np.asarray(rl3),
                               rtol=1e-5, atol=1e-5)
    np.testing.assert_allclose(np.asarray(acc3), np.asarray(ra3),
                               rtol=1e-5, atol=1e-5)

    # Case 4: bf16 logits fed at native width (no host up-cast); smoke run only
    # (no reference assert to avoid bf16 tie/precision sensitivity).
    out4 = out2.astype(jnp.bfloat16)
    loss4, acc4 = sequence_accuracy_loss(out4, tgt2, block_rows=16)
    loss4, acc4 = jax.block_until_ready((loss4, acc4))
    assert bool(jnp.isfinite(loss4)) and bool(jnp.isfinite(acc4))

    print("KERNEL_OK")
</pallas_src>

<mosaic_0001>
module attributes {stable_mosaic.version = 11 : i64} {
  func.func @_seq_acc_loss_kernel(%arg0: i32, %arg1: i32, %arg2: i32, %arg3: memref<1x8x32xf32, #tpu.memory_space<vmem>>, %arg4: memref<1x8x1xi32, #tpu.memory_space<vmem>>, %arg5: memref<1x1x8x128xf32, #tpu.memory_space<vmem>>, %arg6: memref<1x1x8x128xf32, #tpu.memory_space<vmem>>, %arg7: memref<1x1x8x128xf32, #tpu.memory_space<vmem>>, %arg8: memref<8x1xf32, #tpu.memory_space<vmem>>, %arg9: memref<8x1xf32, #tpu.memory_space<vmem>>, %arg10: memref<8x1xf32, #tpu.memory_space<vmem>>) attributes {dimension_semantics = [#tpu.dimension_semantics<parallel>, #tpu.dimension_semantics<parallel>, #tpu.dimension_semantics<arbitrary>], iteration_bounds = array<i64: 1, 2, 1>, scalar_prefetch = 0 : i64, scratch_operands = 3 : i64, tpu.core_type = #tpu.core_type<tc>, window_params = [{transform_indices = @transform_0, window_bounds = array<i64: 1, 8, 32>}, {transform_indices = @transform_1, window_bounds = array<i64: 1, 8, 1>}, {transform_indices = @transform_2, window_bounds = array<i64: 1, 1, 8, 128>}, {transform_indices = @transform_3, window_bounds = array<i64: 1, 1, 8, 128>}, {transform_indices = @transform_4, window_bounds = array<i64: 1, 1, 8, 128>}]} {
    %c0_i32 = arith.constant 0 : i32
    %0 = arith.cmpi eq, %arg2, %c0_i32 : i32
    %1 = arith.extui %0 : i1 to i32
    %c0_i32_0 = arith.constant 0 : i32
    %2 = arith.cmpi ne, %1, %c0_i32_0 : i32
    scf.if %2 {
      %cst_34 = arith.constant 0.000000e+00 : f32
      %74 = vector.broadcast %cst_34 : f32 to vector<8x1xf32>
      %c0_35 = arith.constant 0 : index
      %c0_36 = arith.constant 0 : index
      %75 = vector.load %arg8[%c0_35, %c0_36] : memref<8x1xf32, #tpu.memory_space<vmem>>, vector<8x1xf32>
      tpu.vector_store %arg8[%c0_35, %c0_36], %74 {strides = array<i32>} : memref<8x1xf32, #tpu.memory_space<vmem>>, vector<8x1xf32>,
      %cst_37 = arith.constant 0.000000e+00 : f32
      %76 = vector.broadcast %cst_37 : f32 to vector<8x1xf32>
      %c0_38 = arith.constant 0 : index
      %c0_39 = arith.constant 0 : index
      %77 = vector.load %arg9[%c0_38, %c0_39] : memref<8x1xf32, #tpu.memory_space<vmem>>, vector<8x1xf32>
      tpu.vector_store %arg9[%c0_38, %c0_39], %76 {strides = array<i32>} : memref<8x1xf32, #tpu.memory_space<vmem>>, vector<8x1xf32>,
      %cst_40 = arith.constant 0.000000e+00 : f32
      %78 = vector.broadcast %cst_40 : f32 to vector<8x1xf32>
      %c0_41 = arith.constant 0 : index
      %c0_42 = arith.constant 0 : index
      %79 = vector.load %arg10[%c0_41, %c0_42] : memref<8x1xf32, #tpu.memory_space<vmem>>, vector<8x1xf32>
      tpu.vector_store %arg10[%c0_41, %c0_42], %78 {strides = array<i32>} : memref<8x1xf32, #tpu.memory_space<vmem>>, vector<8x1xf32>,
    } else {
    }
    %c0 = arith.constant 0 : index
    %c0_1 = arith.constant 0 : index
    %c0_2 = arith.constant 0 : index
    %3 = vector.load %arg3[%c0, %c0_1, %c0_2] : memref<1x8x32xf32, #tpu.memory_space<vmem>>, vector<1x8x32xf32>
    %4 = vector.shape_cast %3 : vector<1x8x32xf32> to vector<8x32xf32>
    %c0_3 = arith.constant 0 : index
    %c0_4 = arith.constant 0 : index
    %c0_5 = arith.constant 0 : index
    %5 = vector.load %arg4[%c0_3, %c0_4, %c0_5] : memref<1x8x1xi32, #tpu.memory_space<vmem>>, vector<1x8x1xi32>
    %6 = vector.shape_cast %5 : vector<1x8x1xi32> to vector<8x1xi32>
    %c1_i32 = arith.constant 1 : i32
    %7 = arith.muli %arg0, %c1_i32 : i32
    %8 = arith.addi %7, %arg2 : i32
    %c8_i32 = arith.constant 8 : i32
    %9 = arith.muli %8, %c8_i32 : i32
    %10 = tpu.iota {dimensions = array<i32: 0>} : vector<8x1xi32>
    %11 = vector.broadcast %9 : i32 to vector<8x1xi32>
    %12 = arith.addi %11, %10 : vector<8x1xi32>
    %c8_i32_6 = arith.constant 8 : i32
    %13 = vector.broadcast %c8_i32_6 : i32 to vector<8x1xi32>
    %14 = arith.cmpi slt, %12, %13 : vector<8x1xi32>
    %c0_i32_7 = arith.constant 0 : i32
    %15 = vector.broadcast %c0_i32_7 : i32 to vector<8x1xi32>
    %16 = arith.cmpi ne, %6, %15 : vector<8x1xi32>
    %17 = arith.andi %14, %16 : vector<8x1xi1>
    %18 = arith.extui %17 : vector<8x1xi1> to vector<8x1xi32>
    %19 = arith.sitofp %18 : vector<8x1xi32> to vector<8x1xf32>
    %c0_i32_8 = arith.constant 0 : i32
    %20 = vector.broadcast %c0_i32_8 : i32 to vector<8x1xi32>
    %21 = arith.select %17, %6, %20 : vector<8x1xi1>, vector<8x1xi32>
    %cst = arith.constant dense<0xFF800000> : vector<8xf32>
    %22 = vector.multi_reduction <maximumf>, %4, %cst [1] : vector<8x32xf32> to vector<8xf32>
    %23 = vector.shape_cast %22 : vector<8xf32> to vector<8x1xf32>
    %24 = vector.broadcast %23 : vector<8x1xf32> to vector<8x32xf32>
    %25 = arith.subf %4, %24 : vector<8x32xf32>
    %26 = math.exp %25 : vector<8x32xf32>
    %cst_9 = arith.constant dense<0.000000e+00> : vector<8xf32>
    %27 = vector.multi_reduction <add>, %26, %cst_9 [1] : vector<8x32xf32> to vector<8xf32>
    %28 = vector.shape_cast %27 : vector<8xf32> to vector<8x1xf32>
    %29 = math.log %28 : vector<8x1xf32>
    %30 = tpu.iota {dimensions = array<i32: 1>} : vector<8x32xi32>
    %31 = vector.broadcast %21 : vector<8x1xi32> to vector<8x32xi32>
    %32 = arith.cmpi eq, %30, %31 : vector<8x32xi32>
    %cst_10 = arith.constant 0.000000e+00 : f32
    %33 = vector.broadcast %cst_10 : f32 to vector<8x32xf32>
    %34 = arith.select %32, %25, %33 : vector<8x32xi1>, vector<8x32xf32>
    %cst_11 = arith.constant dense<0.000000e+00> : vector<8xf32>
    %35 = vector.multi_reduction <add>, %34, %cst_11 [1] : vector<8x32xf32> to vector<8xf32>
    %36 = vector.shape_cast %35 : vector<8xf32> to vector<8x1xf32>
    %37 = arith.subf %36, %29 : vector<8x1xf32>
    %cst_12 = arith.constant dense<0.000000e+00> : vector<8xf32>
    %38 = vector.multi_reduction <add>, %25, %cst_12 [1] : vector<8x32xf32> to vector<8xf32>
    %39 = vector.shape_cast %38 : vector<8xf32> to vector<8x1xf32>
    %cst_13 = arith.constant 0.948387086 : f32
    %40 = vector.broadcast %cst_13 : f32 to vector<8x1xf32>
    %41 = arith.mulf %40, %37 : vector<8x1xf32>
    %cst_14 = arith.constant 3.200000e+01 : f32
    %42 = vector.broadcast %cst_14 : f32 to vector<8x1xf32>
    %43 = arith.mulf %42, %29 : vector<8x1xf32>
    %44 = arith.subf %39, %43 : vector<8x1xf32>
    %cst_15 = arith.constant 0.0016129032 : f32
    %45 = vector.broadcast %cst_15 : f32 to vector<8x1xf32>
    %46 = arith.mulf %45, %44 : vector<8x1xf32>
    %47 = arith.addf %41, %46 : vector<8x1xf32>
    %cst_16 = arith.constant -0.370214611 : f32
    %48 = vector.broadcast %cst_16 : f32 to vector<8x1xf32>
    %49 = arith.subf %48, %47 : vector<8x1xf32>
    %cst_17 = arith.constant 0.000000e+00 : f32
    %50 = vector.broadcast %cst_17 : f32 to vector<8x1xf32>
    %51 = arith.select %17, %49, %50 : vector<8x1xi1>, vector<8x1xf32>
    %cst_18 = arith.constant 0.000000e+00 : f32
    %52 = vector.broadcast %cst_18 : f32 to vector<8x32xf32>
    %53 = arith.cmpf oeq, %25, %52 : vector<8x32xf32>
    %c32_i32 = arith.constant 32 : i32
    %54 = vector.broadcast %c32_i32 : i32 to vector<8x32xi32>
    %55 = arith.select %53, %30, %54 : vector<8x32xi1>, vector<8x32xi32>
    %cst_19 = arith.constant dense<2147483647> : vector<8xi32>
    %56 = vector.multi_reduction <minsi>, %55, %cst_19 [1] : vector<8x32xi32> to vector<8xi32>
    %57 = vector.shape_cast %56 : vector<8xi32> to vector<8x1xi32>
    %58 = arith.cmpi eq, %57, %21 : vector<8x1xi32>
    %59 = arith.andi %17, %58 : vector<8x1xi1>
    %60 = arith.extui %59 : vector<8x1xi1> to vector<8x1xi32>
    %61 = arith.sitofp %60 : vector<8x1xi32> to vector<8x1xf32>
    %c0_20 = arith.constant 0 : index
    %c0_21 = arith.constant 0 : index
    %62 = vector.load %arg8[%c0_20, %c0_21] : memref<8x1xf32, #tpu.memory_space<vmem>>, vector<8x1xf32>
    %63 = arith.addf %62, %51 : vector<8x1xf32>
    %c0_22 = arith.constant 0 : index
    %c0_23 = arith.constant 0 : index
    %64 = vector.load %arg8[%c0_22, %c0_23] : memref<8x1xf32, #tpu.memory_space<vmem>>, vector<8x1xf32>
    tpu.vector_store %arg8[%c0_22, %c0_23], %63 {strides = array<i32>} : memref<8x1xf32, #tpu.memory_space<vmem>>, vector<8x1xf32>,
    %c0_24 = arith.constant 0 : index
    %c0_25 = arith.constant 0 : index
    %65 = vector.load %arg9[%c0_24, %c0_25] : memref<8x1xf32, #tpu.memory_space<vmem>>, vector<8x1xf32>
    %66 = arith.addf %65, %61 : vector<8x1xf32>
    %c0_26 = arith.constant 0 : index
    %c0_27 = arith.constant 0 : index
    %67 = vector.load %arg9[%c0_26, %c0_27] : memref<8x1xf32, #tpu.memory_space<vmem>>, vector<8x1xf32>
    tpu.vector_store %arg9[%c0_26, %c0_27], %66 {strides = array<i32>} : memref<8x1xf32, #tpu.memory_space<vmem>>, vector<8x1xf32>,
    %c0_28 = arith.constant 0 : index
    %c0_29 = arith.constant 0 : index
    %68 = vector.load %arg10[%c0_28, %c0_29] : memref<8x1xf32, #tpu.memory_space<vmem>>, vector<8x1xf32>
    %69 = arith.addf %68, %19 : vector<8x1xf32>
    %c0_30 = arith.constant 0 : index
    %c0_31 = arith.constant 0 : index
    %70 = vector.load %arg10[%c0_30, %c0_31] : memref<8x1xf32, #tpu.memory_space<vmem>>, vector<8x1xf32>
    tpu.vector_store %arg10[%c0_30, %c0_31], %69 {strides = array<i32>} : memref<8x1xf32, #tpu.memory_space<vmem>>, vector<8x1xf32>,
    %c0_i32_32 = arith.constant 0 : i32
    %71 = arith.cmpi eq, %arg2, %c0_i32_32 : i32
    %72 = arith.extui %71 : i1 to i32
    %c0_i32_33 = arith.constant 0 : i32
    %73 = arith.cmpi ne, %72, %c0_i32_33 : i32
    scf.if %73 {
      %c0_34 = arith.constant 0 : index
      %c0_35 = arith.constant 0 : index
      %74 = vector.load %arg8[%c0_34, %c0_35] : memref<8x1xf32, #tpu.memory_space<vmem>>, vector<8x1xf32>
      %75 = vector.shape_cast %74 : vector<8x1xf32> to vector<1x8x1xf32>
      %cst_36 = arith.constant dense<0.000000e+00> : vector<1xf32>
      %76 = vector.multi_reduction <add>, %75, %cst_36 [1, 2] : vector<1x8x1xf32> to vector<1xf32>
      %77 = vector.shape_cast %76 : vector<1xf32> to vector<1x1x1xf32>
      %78 = vector.extract %77[0, 0, 0] : f32 from vector<1x1x1xf32>
      %79 = vector.broadcast %78 : f32 to vector<1x1xf32>
      %80 = vector.shape_cast %79 : vector<1x1xf32> to vector<1x1x1x1xf32>
      %81 = vector.broadcast %80 : vector<1x1x1x1xf32> to vector<1x1x8x128xf32>
      %c0_37 = arith.constant 0 : index
      %c0_38 = arith.constant 0 : index
      %c0_39 = arith.constant 0 : index
      %c0_40 = arith.constant 0 : index
      %82 = vector.load %arg5[%c0_37, %c0_38, %c0_39, %c0_40] : memref<1x1x8x128xf32, #tpu.memory_space<vmem>>, vector<1x1x8x128xf32>
      tpu.vector_store %arg5[%c0_37, %c0_38, %c0_39, %c0_40], %81 {strides = array<i32>} : memref<1x1x8x128xf32, #tpu.memory_space<vmem>>, vector<1x1x8x128xf32>,
      %c0_41 = arith.constant 0 : index
      %c0_42 = arith.constant 0 : index
      %83 = vector.load %arg9[%c0_41, %c0_42] : memref<8x1xf32, #tpu.memory_space<vmem>>, vector<8x1xf32>
      %84 = vector.shape_cast %83 : vector<8x1xf32> to vector<1x8x1xf32>
      %cst_43 = arith.constant dense<0.000000e+00> : vector<1xf32>
      %85 = vector.multi_reduction <add>, %84, %cst_43 [1, 2] : vector<1x8x1xf32> to vector<1xf32>
      %86 = vector.shape_cast %85 : vector<1xf32> to vector<1x1x1xf32>
      %87 = vector.extract %86[0, 0, 0] : f32 from vector<1x1x1xf32>
      %88 = vector.broadcast %87 : f32 to vector<1x1xf32>
      %89 = vector.shape_cast %88 : vector<1x1xf32> to vector<1x1x1x1xf32>
      %90 = vector.broadcast %89 : vector<1x1x1x1xf32> to vector<1x1x8x128xf32>
      %c0_44 = arith.constant 0 : index
      %c0_45 = arith.constant 0 : index
      %c0_46 = arith.constant 0 : index
      %c0_47 = arith.constant 0 : index
      %91 = vector.load %arg6[%c0_44, %c0_45, %c0_46, %c0_47] : memref<1x1x8x128xf32, #tpu.memory_space<vmem>>, vector<1x1x8x128xf32>
      tpu.vector_store %arg6[%c0_44, %c0_45, %c0_46, %c0_47], %90 {strides = array<i32>} : memref<1x1x8x128xf32, #tpu.memory_space<vmem>>, vector<1x1x8x128xf32>,
      %c0_48 = arith.constant 0 : index
      %c0_49 = arith.constant 0 : index
      %92 = vector.load %arg10[%c0_48, %c0_49] : memref<8x1xf32, #tpu.memory_space<vmem>>, vector<8x1xf32>
      %93 = vector.shape_cast %92 : vector<8x1xf32> to vector<1x8x1xf32>
      %cst_50 = arith.constant dense<0.000000e+00> : vector<1xf32>
      %94 = vector.multi_reduction <add>, %93, %cst_50 [1, 2] : vector<1x8x1xf32> to vector<1xf32>
      %95 = vector.shape_cast %94 : vector<1xf32> to vector<1x1x1xf32>
      %96 = vector.extract %95[0, 0, 0] : f32 from vector<1x1x1xf32>
      %97 = vector.broadcast %96 : f32 to vector<1x1xf32>
      %98 = vector.shape_cast %97 : vector<1x1xf32> to vector<1x1x1x1xf32>
      %99 = vector.broadcast %98 : vector<1x1x1x1xf32> to vector<1x1x8x128xf32>
      %c0_51 = arith.constant 0 : index
      %c0_52 = arith.constant 0 : index
      %c0_53 = arith.constant 0 : index
      %c0_54 = arith.constant 0 : index
      %100 = vector.load %arg7[%c0_51, %c0_52, %c0_53, %c0_54] : memref<1x1x8x128xf32, #tpu.memory_space<vmem>>, vector<1x1x8x128xf32>
      tpu.vector_store %arg7[%c0_51, %c0_52, %c0_53, %c0_54], %99 {strides = array<i32>} : memref<1x1x8x128xf32, #tpu.memory_space<vmem>>, vector<1x1x8x128xf32>,
    } else {
    }
    return
  }
  func.func @transform_0(%arg0: i32, %arg1: i32, %arg2: i32) -> (i32, i32, i32) {
    %c1_i32 = arith.constant 1 : i32
    %0 = arith.muli %arg0, %c1_i32 : i32
    %1 = arith.addi %0, %arg2 : i32
    %c0_i32 = arith.constant 0 : i32
    %c0_i32_0 = arith.constant 0 : i32
    return %arg1, %1, %c0_i32 : i32, i32, i32
  }
  func.func @transform_1(%arg0: i32, %arg1: i32, %arg2: i32) -> (i32, i32, i32) {
    %c1_i32 = arith.constant 1 : i32
    %0 = arith.muli %arg0, %c1_i32 : i32
    %1 = arith.addi %0, %arg2 : i32
    %c0_i32 = arith.constant 0 : i32
    %c0_i32_0 = arith.constant 0 : i32
    return %arg1, %1, %c0_i32 : i32, i32, i32
  }
  func.func @transform_2(%arg0: i32, %arg1: i32, %arg2: i32) -> (i32, i32, i32, i32) {
    %c0_i32 = arith.constant 0 : i32
    %c0_i32_0 = arith.constant 0 : i32
    %c0_i32_1 = arith.constant 0 : i32
    return %arg0, %arg1, %c0_i32, %c0_i32_0 : i32, i32, i32, i32
  }
  func.func @transform_3(%arg0: i32, %arg1: i32, %arg2: i32) -> (i32, i32, i32, i32) {
    %c0_i32 = arith.constant 0 : i32
    %c0_i32_0 = arith.constant 0 : i32
    %c0_i32_1 = arith.constant 0 : i32
    return %arg0, %arg1, %c0_i32, %c0_i32_0 : i32, i32, i32, i32
  }
  func.func @transform_4(%arg0: i32, %arg1: i32, %arg2: i32) -> (i32, i32, i32, i32) {
    %c0_i32 = arith.constant 0 : i32
    %c0_i32_0 = arith.constant 0 : i32
    %c0_i32_1 = arith.constant 0 : i32
    return %arg0, %arg1, %c0_i32, %c0_i32_0 : i32, i32, i32, i32
  }
}

</mosaic_0001>

<llo_original>
// kernel: tpu_custom_call.1
$region0: #{tpu_custom_call.1}
  #allocation0 [shape = 'u32[]', space=smem, size = 0x4, offset = 0x4, fixed_abs, tag = 'smem constant byte address 0x4 - core index']
  #allocation1 [shape = 'u32[144,128]{1,0:T(1,128)}', space=vmem, size = 0x12000, scoped, tag = 'internal scratch']
  #allocation2 [shape = 'f32[8,1]{1,0:T(8,128)}', space=vmem, size = 0x1000, scoped, tag = 'scratch operand']
  #allocation3 [shape = 'f32[8,1]{1,0:T(8,128)}', space=vmem, size = 0x1000, scoped, tag = 'scratch operand']
  #allocation4 [shape = 'f32[8,1]{1,0:T(8,128)}', space=vmem, size = 0x1000, scoped, tag = 'scratch operand']
  %s0 = inlined_call_operand.vmem [shape: f32[2,8,32], index: 0, kind: input, shape index: {}]
  %s1 = inlined_call_operand.vmem [shape: s32[2,8,1], index: 1, kind: input, shape index: {}]
  %s2 = inlined_call_operand.hbm [shape: f32[1,2,8,128], index: 2, kind: output, shape index: {0}]
  %s3 = inlined_call_operand.hbm [shape: f32[1,2,8,128], index: 3, kind: output, shape index: {1}]
  %s4 = inlined_call_operand.hbm [shape: f32[1,2,8,128], index: 4, kind: output, shape index: {2}]
  %5 = xla_tuple %s2, %s3, %s4
  %s6 = sld [smem:[#allocation0]]
  $region65: #{tpu_custom_call.1} parent=0
    _
  %s8 = ssub.s32 1, %s6
  %s9 = scalar_select 0, %s8, %s6
  $region1: #{tpu_custom_call.1} parent=0
    #allocation5 [shape = 'u8[8192]{0}', space=vmem, size = 0x2000, scoped, tag = 'output window, operand 0']
    #allocation6 [shape = 's32[2]{0}', space=sflag, size = 0x8, scoped, tag = 'scoped memory for tpu_custom_call.1']
    #allocation7 [shape = 'u8[8192]{0}', space=vmem, size = 0x2000, scoped, tag = 'output window, operand 1']
    #allocation8 [shape = 's32[2]{0}', space=sflag, size = 0x8, scoped, tag = 'scoped memory for tpu_custom_call.1']
    #allocation9 [shape = 'u8[8192]{0}', space=vmem, size = 0x2000, scoped, tag = 'output window, operand 2']
    %10 = vsyncpa [#allocation6], 0
    %s11 = scalar_lea.sflag [#allocation6], 1
    %12 = vsyncpa %s11, 0
    %13 = vsyncpa [#allocation8], 0
    %s14 = scalar_lea.sflag [#allocation8], 1
    %15 = vsyncpa %s14, 0
    loop: start=0, step=1, limit=4
    $region2: #{tpu_custom_call.1} parent=1 // loop_pre_header
      _
    $region3: #{tpu_custom_call.1} parent=1 // loop_header
      %s17 = sphi 0, %s21
      %p18 = scmp.ge.s32.totalorder %s17, 4
      %s24 = sphi 0, %s43
      %s25 = sphi 0, %s39
      %s26 = sphi 0, %s35
      %s27 = sphi 0, %s24
      %s28 = sphi 0, %s25
      %s29 = sphi 0, %s26
      %s30 = sphi 0, %s27
      %s31 = sphi 0, %s28
      %s32 = sphi 0, %s29
      %s50 = sphi 0, %s52
      %s53 = sphi 0, %s50
      %s54 = sphi 0, %s53
      %s70 = sphi 0, %s54
      %s80 = sphi 0, %s82
      %s83 = sphi 0, %s80
      %s84 = sphi 0, %s83
      %s100 = sphi 0, %s84
      %s108 = sphi 0, %s110
      %s111 = sphi 0, %s108
      %s112 = sphi 0, %s111
      %s128 = sphi 0, %s112
      %s136 = sphi 0, %s138
      %s139 = sphi 0, %s136
      %s140 = sphi 0, %s139
      %s156 = sphi 0, %s140
      %s164 = sphi 0, %s166
      %s167 = sphi 0, %s164
      %s168 = sphi 0, %s167
      %s184 = sphi 0, %s168
    $region4: #{tpu_custom_call.1} parent=1 // loop_header_branch
      %20 = sbr.rel (%p18) target = $region8
    $region5: #{tpu_custom_call.1} parent=1 // loop_body
      %s22 = ssub.s32 %s17, 1
      %s23 = ssub.s32 %s17, 2
      %s33 = sadd.s32 1, %s26
      %p34 = scmp.ge.s32.totalorder %s33, 1
      %s35 = scalar_select %p34, 0, %s33
      %s36 = sadd.s32 1, %s25
      %s37 = scalar_select %p34, %s36, %s25
      %p38 = scmp.ge.s32.totalorder %s37, 2
      %s39 = scalar_select %p38, 0, %s37
      %s40 = sadd.s32 1, %s24
      %s41 = scalar_select %p38, %s40, %s24
      %p42 = scmp.ge.s32.totalorder %s41, 1
      %s43 = scalar_select %p42, 0, %s41
      %s44 = sadd.s32 %s24, %s26
      %s45 = sadd.s32 %s43, %s35
      %s46 = ssub.s32 %s25, %s39
      %s47 = ssub.s32 %s44, %s45
      %s48 = sor.u32 %s46, %s47
      %p49 = scmp.eq.s32.totalorder %s48, 0
      %s51 = sadd.s32 %s50, 1
      %s52 = scalar_select %p49, %s50, %s51
      %p55 = pneg %p49
      %p56 = scmp.eq.s32.totalorder %s17, 1
      %p57 = por %p55, %p56
      %p58 = scmp.ne.s32.totalorder %s50, %s53
      %p59 = scmp.eq.s32.totalorder %s17, 0
      %p60 = por %p58, %p59
      %p61 = scmp.ne.s32.totalorder %s50, %s53
      %p62 = scmp.eq.s32.totalorder %s22, 1
      %p63 = por %p61, %p62
      %p64 = scmp.ne.s32.totalorder %s53, %s54
      %p65 = scmp.eq.s32.totalorder %s22, 0
      %p66 = por %p64, %p65
      %p67 = scmp.ne.s32.totalorder %s53, %s54
      %p68 = scmp.eq.s32.totalorder %s23, 1
      %p69 = por %p67, %p68
      %p71 = scmp.ne.s32.totalorder %s54, %s70
      %p72 = scmp.eq.s32.totalorder %s23, 0
      %p73 = por %p71, %p72
      %s74 = sadd.s32 %s24, %s26
      %s75 = sadd.s32 %s43, %s35
      %s76 = ssub.s32 %s25, %s39
      %s77 = ssub.s32 %s74, %s75
      %s78 = sor.u32 %s76, %s77
      %p79 = scmp.eq.s32.totalorder %s78, 0
      %s81 = sadd.s32 %s80, 1
      %s82 = scalar_select %p79, %s80, %s81
      %p85 = pneg %p79
      %p86 = scmp.eq.s32.totalorder %s17, 1
      %p87 = por %p85, %p86
      %p88 = scmp.ne.s32.totalorder %s80, %s83
      %p89 = scmp.eq.s32.totalorder %s17, 0
      %p90 = por %p88, %p89
      %p91 = scmp.ne.s32.totalorder %s80, %s83
      %p92 = scmp.eq.s32.totalorder %s22, 1
      %p93 = por %p91, %p92
      %p94 = scmp.ne.s32.totalorder %s83, %s84
      %p95 = scmp.eq.s32.totalorder %s22, 0
      %p96 = por %p94, %p95
      %p97 = scmp.ne.s32.totalorder %s83, %s84
      %p98 = scmp.eq.s32.totalorder %s23, 1
      %p99 = por %p97, %p98
      %p101 = scmp.ne.s32.totalorder %s84, %s100
      %p102 = scmp.eq.s32.totalorder %s23, 0
      %p103 = por %p101, %p102
      %s104 = ssub.s32 %s24, %s43
      %s105 = ssub.s32 %s25, %s39
      %s106 = sor.u32 %s104, %s105
      %p107 = scmp.eq.s32.totalorder %s106, 0
      %s109 = sadd.s32 %s108, 1
      %s110 = scalar_select %p107, %s108, %s109
      %p113 = pneg %p107
      %p114 = scmp.eq.s32.totalorder %s17, 1
      %p115 = por %p113, %p114
      %p116 = scmp.ne.s32.totalorder %s108, %s111
      %p117 = scmp.eq.s32.totalorder %s17, 0
      %p118 = por %p116, %p117
      %p119 = scmp.ne.s32.totalorder %s108, %s111
      %p120 = scmp.eq.s32.totalorder %s22, 1
      %p121 = por %p119, %p120
      %p122 = scmp.ne.s32.totalorder %s111, %s112
      %p123 = scmp.eq.s32.totalorder %s22, 0
      %p124 = por %p122, %p123
      %p125 = scmp.ne.s32.totalorder %s111, %s112
      %p126 = scmp.eq.s32.totalorder %s23, 1
      %p127 = por %p125, %p126
      %p129 = scmp.ne.s32.totalorder %s112, %s128
      %p130 = scmp.eq.s32.totalorder %s23, 0
      %p131 = por %p129, %p130
      %s132 = ssub.s32 %s24, %s43
      %s133 = ssub.s32 %s25, %s39
      %s134 = sor.u32 %s132, %s133
      %p135 = scmp.eq.s32.totalorder %s134, 0
      %s137 = sadd.s32 %s136, 1
      %s138 = scalar_select %p135, %s136, %s137
      %p141 = pneg %p135
      %p142 = scmp.eq.s32.totalorder %s17, 1
      %p143 = por %p141, %p142
      %p144 = scmp.ne.s32.totalorder %s136, %s139
      %p145 = scmp.eq.s32.totalorder %s17, 0
      %p146 = por %p144, %p145
      %p147 = scmp.ne.s32.totalorder %s136, %s139
      %p148 = scmp.eq.s32.totalorder %s22, 1
      %p149 = por %p147, %p148
      %p150 = scmp.ne.s32.totalorder %s139, %s140
      %p151 = scmp.eq.s32.totalorder %s22, 0
      %p152 = por %p150, %p151
      %p153 = scmp.ne.s32.totalorder %s139, %s140
      %p154 = scmp.eq.s32.totalorder %s23, 1
      %p155 = por %p153, %p154
      %p157 = scmp.ne.s32.totalorder %s140, %s156
      %p158 = scmp.eq.s32.totalorder %s23, 0
      %p159 = por %p157, %p158
      %s160 = ssub.s32 %s24, %s43
      %s161 = ssub.s32 %s25, %s39
      %s162 = sor.u32 %s160, %s161
      %p163 = scmp.eq.s32.totalorder %s162, 0
      %s165 = sadd.s32 %s164, 1
      %s166 = scalar_select %p163, %s164, %s165
      %p169 = pneg %p163
      %p170 = scmp.eq.s32.totalorder %s17, 1
      %p171 = por %p169, %p170
      %p172 = scmp.ne.s32.totalorder %s164, %s167
      %p173 = scmp.eq.s32.totalorder %s17, 0
      %p174 = por %p172, %p173
      %p175 = scmp.ne.s32.totalorder %s164, %s167
      %p176 = scmp.eq.s32.totalorder %s22, 1
      %p177 = por %p175, %p176
      %p178 = scmp.ne.s32.totalorder %s167, %s168
      %p179 = scmp.eq.s32.totalorder %s22, 0
      %p180 = por %p178, %p179
      %p181 = scmp.ne.s32.totalorder %s167, %s168
      %p182 = scmp.eq.s32.totalorder %s23, 1
      %p183 = por %p181, %p182
      %p185 = scmp.ne.s32.totalorder %s168, %s184
      %p186 = scmp.eq.s32.totalorder %s23, 0
      %p187 = por %p185, %p186
      %p188 = scmp.le.s32.totalorder 1, %s17
      %p189 = scmp.lt.s32.totalorder %s17, 3
      %p190 = pnand %p188, %p189
      %p191 = pneg %p190
      // Predicated region
      $region9: #{tpu_custom_call.1} parent=5 // pred_check
        _
      $region10: #{tpu_custom_call.1} parent=5 // pred_check_branch
        %193 = sbr.rel (%p190) target = $region12
      $region11: #{tpu_custom_call.1} parent=5 // pred_region
        %s194 = ssub.s32 %s17, 1
      $region12: #{tpu_custom_call.1} parent=5 // pred_fallthru
        _
      %p195 = scmp.lt.s32.totalorder %s17, 2
      // Predicated region
      $region13: #{tpu_custom_call.1} parent=5 // pred_check
        %p196 = pneg %p195
      $region14: #{tpu_custom_call.1} parent=5 // pred_check_branch
        %198 = sbr.rel (%p196) target = $region16
      $region15: #{tpu_custom_call.1} parent=5 // pred_region
        // Predicated region
        $region17: #{tpu_custom_call.1} parent=15 // pred_check
          %p199 = pneg %p60
        $region18: #{tpu_custom_call.1} parent=15 // pred_check_branch
          %201 = sbr.rel (%p199) target = $region20
        $region19: #{tpu_custom_call.1} parent=15 // pred_region
          %s202 = sadd.s32 %s24, %s26
          %p203 = scmp.lt.s32.totalorder %s25, 1
          %s204 = scalar_select %p203, %s25, 1
          %p205 = scmp.lt.s32.totalorder %s202, 0
          %s206 = scalar_select %p205, %s202, 0
          %s207 = sadd.s32 %s206, %s204
          %s208 = smul.addr %s207, 8
          %s209 = scalar_lea.vmem %s0, %s208
          %s210 = sadd.s32 %s24, %s26
        $region20: #{tpu_custom_call.1} parent=15 // pred_fallthru
          _
        // Predicated region
        $region21: #{tpu_custom_call.1} parent=15 // pred_check
          %p211 = pneg %p90
        $region22: #{tpu_custom_call.1} parent=15 // pred_check_branch
          %213 = sbr.rel (%p211) target = $region24
        $region23: #{tpu_custom_call.1} parent=15 // pred_region
          %s214 = sadd.s32 %s24, %s26
          %p215 = scmp.lt.s32.totalorder %s25, 1
          %s216 = scalar_select %p215, %s25, 1
          %p217 = scmp.lt.s32.totalorder %s214, 0
          %s218 = scalar_select %p217, %s214, 0
          %s219 = sadd.s32 %s218, %s216
          %s220 = smul.addr %s219, 8
          %s221 = scalar_lea.vmem %s1, %s220
          %s222 = sadd.s32 %s24, %s26
        $region24: #{tpu_custom_call.1} parent=15 // pred_fallthru
          _
      $region16: #{tpu_custom_call.1} parent=5 // pred_fallthru
        _
      %p223 = scmp.le.s32.totalorder 1, %s17
      %p224 = scmp.lt.s32.totalorder %s17, 3
      %p225 = pnand %p223, %p224
      %p226 = pneg %p225
      // Predicated region
      $region25: #{tpu_custom_call.1} parent=5 // pred_check
        _
      $region26: #{tpu_custom_call.1} parent=5 // pred_check_branch
        %228 = sbr.rel (%p225) target = $region28
      $region27: #{tpu_custom_call.1} parent=5 // pred_region
        %s229 = ssub.s32 %s17, 1
        %s230 = sadd.s32 %s27, %s29
        %p231 = scmp.lt.s32.totalorder %s28, 1
        %s232 = scalar_select %p231, %s28, 1
        %p233 = scmp.lt.s32.totalorder %s230, 0
        %s234 = scalar_select %p233, %s230, 0
        %s235 = sadd.s32 %s234, %s232
        %s236 = smul.addr %s235, 8
        %s237 = scalar_lea.vmem %s0, %s236
        %p238 = pneg %p66
        %p239 = pneg %p63
        %s240 = sadd.s32 %s27, %s29
        %p241 = scmp.lt.s32.totalorder %s28, 1
        %s242 = scalar_select %p241, %s28, 1
        %p243 = scmp.lt.s32.totalorder %s240, 0
        %s244 = scalar_select %p243, %s240, 0
        %s245 = sadd.s32 %s244, %s242
        %s246 = smul.addr %s245, 8
        %s247 = scalar_lea.vmem %s1, %s246
        %p248 = pneg %p96
        %p249 = pneg %p93
        %p250 = pneg %p124
        %p251 = pneg %p121
        %s252 = sand.u32 %s111, 1
        %s253 = scalar_lea.sflag [#allocation6], %s252
        %s254 = sand.u32 %s111, 1
        %s255 = smul.addr %s254, 8
        %s256 = scalar_lea.vmem [#allocation5], %s255
        %p257 = pneg %p152
        %p258 = pneg %p149
        %s259 = sand.u32 %s22, 1
        %s260 = scalar_lea.sflag [#allocation8], %s259
        %s261 = sand.u32 %s139, 1
        %s262 = smul.addr %s261, 8
        %s263 = scalar_lea.vmem [#allocation7], %s262
        %p264 = pneg %p180
        %p265 = pneg %p177
        %s266 = sand.u32 %s22, 1
        %s267 = scalar_lea.sflag [#allocation8], %s266
        %s268 = sand.u32 %s167, 1
        %s269 = smul.addr %s268, 8
        %s270 = scalar_lea.vmem [#allocation9], %s269
        %s271 = sadd.s32 %s27, %s29
        %p272 = scmp.lt.s32.totalorder %s28, 1
        %s273 = scalar_select %p272, %s28, 1
        %p274 = scmp.lt.s32.totalorder %s271, 0
        %s275 = scalar_select %p274, %s271, 0
        %s276 = sadd.s32 %s275, %s273
        %s277 = smul.addr %s276, 8
        %s278 = scalar_lea.vmem %s0, %s277
        %s279 = sadd.s32 %s27, %s29
        %s280 = sadd.s32 %s27, %s29
        %p281 = scmp.lt.s32.totalorder %s28, 1
        %s282 = scalar_select %p281, %s28, 1
        %p283 = scmp.lt.s32.totalorder %s280, 0
        %s284 = scalar_select %p283, %s280, 0
        %s285 = sadd.s32 %s284, %s282
        %s286 = smul.addr %s285, 8
        %s287 = scalar_lea.vmem %s1, %s286
        %s288 = sadd.s32 %s27, %s29
        %p289 = scmp.eq.s32.totalorder %s29, 0
        // Predicated region
        $region29: #{tpu_custom_call.1} parent=27 // pred_check
          %p290 = pneg %p289
        $region30: #{tpu_custom_call.1} parent=27 // pred_check_branch
          %292 = sbr.rel (%p290) target = $region32
        $region31: #{tpu_custom_call.1} parent=27 // pred_region
          %vm293 = vcmask 7168
          %294 = vst.msk [vmem:[#allocation2] sm:$0xff] %vm293, 0.0
          %295 = vst.msk [vmem:[#allocation3] sm:$0xff] %vm293, 0.0
          %296 = vst.msk [vmem:[#allocation4] sm:$0xff] %vm293, 0.0
        $region32: #{tpu_custom_call.1} parent=27 // pred_fallthru
          _
        %v297 = vld [vmem:[%s278] sm:$0xff]
        %v298 = vld [vmem:[%s287] sm:$0xff]
        %s299 = sadd.s32 %s27, %s29
        %s300 = smul.u32 %s299, 8
        %v301 = vlaneseq
        %v302 = vshrl.u32 %v301, 7
        %v303 = vstv %s300
        %v304 = vadd.s32 %v303, %v302
        %vm305 = vcmp.lt.s32.totalorder %v304, 8
        %vm306 = vcmp.ne.s32.totalorder %v298, 0
        %vm307 = vmand %vm305, %vm306
        %v308 = vsel %vm307, 1, 0
        %v309 = vcvt.s32.f32 %v308
        %v310 = vsel %vm307, %v298, 0
        %vm311 = vcmask 261120
        %v312 = vsel %vm311, %v297, -inf
        %313 = vmax.xlane.f32.xlu0 %v312
        %v314 = vpop.xlane.xlu0 %313
        %v315 = vsub.f32 %v297, %v314
        %v316 = vmul.f32 %v315, 1.442695
        %v317 = vpow.pop %v316
        %v318 = vsel %vm311, %v317, 0.0
        %319 = vadd.xlane.f32.xlu0 %v318
        %v320 = vpop.xlane.xlu0 %319
        %v321 = vlog2.pop %v320
        %v322 = vmul.f32 %v321, 0.6931472
        %v323 = vlaneseq
        %v324 = vand.u32 %v323, 127
        %325 = vset.pattern.permute.xlu0 0
        %326 = vperm.xlu0 %325, %v310
        %v327 = vpop.permute.xlu0 %326
        %vm328 = vcmp.eq.s32.totalorder %v324, %v327
        %v329 = vsel %vm328, %v315, 0.0
        %v330 = vsel %vm311, %v329, 0.0
        %331 = vadd.xlane.f32.xlu0 %v330
        %v332 = vpop.xlane.xlu0 %331
        %v333 = vsub.f32 %v332, %v322
        %v334 = vsel %vm311, %v315, 0.0
        %335 = vadd.xlane.f32.xlu0 %v334
        %v336 = vpop.xlane.xlu0 %335
        %v337 = vmul.f32 %v333, 0.9483871
        %v338 = vmul.f32 %v322, 32.0
        %v339 = vsub.f32 %v336, %v338
        %v340 = vmul.f32 %v339, 0.0016129032
        %v341 = vadd.f32 %v337, %v340
        %v342 = vsub.f32 -0.3702146, %v341
        %v343 = vsel %vm307, %v342, 0.0
        %vm344 = vcmp.eq.f32.partialorder %v315, 0.0
        %v345 = vsel %vm344, %v324, 32
        %v346 = vsel %vm311, %v345, 2147483647
        %v347 = vand.u32 %v346, 65535
        %v348 = vshra.s32 %v346, 16
        %v349 = vcvt.s32.f32 %v347
        %v350 = vcvt.s32.f32 %v348
        %351 = vmin.xlane.f32.xlu0 %v350
        %v352 = vpop.xlane.xlu0 %351
        %vm353 = vcmp.eq.f32.partialorder %v350, %v352
        %v354 = vsel %vm353, %v349, inf
        %355 = vmin.xlane.f32.xlu0 %v354
        %v356 = vpop.xlane.xlu0 %355
        %v357 = vcvt.f32.s32 %v356
        %v358 = vcvt.f32.s32 %v352
        %v359 = vshll.u32 %v358, 16
        %v360 = vadd.s32 %v359, %v357
        %vm361 = vcmp.eq.s32.totalorder %v360, %v310
        %vm362 = vmand %vm307, %vm361
        %v363 = vsel %vm362, 1, 0
        %v364 = vcvt.s32.f32 %v363
        %v365 = vld [vmem:[#allocation2] sm:$0xff]
        %v366 = vadd.f32 %v365, %v343
        %vm367 = vcmask 7168
        %368 = vst.msk [vmem:[#allocation2] sm:$0xff] %vm367, %v366
        %v369 = vld [vmem:[#allocation3] sm:$0xff]
        %v370 = vadd.f32 %v369, %v364
        %371 = vst.msk [vmem:[#allocation3] sm:$0xff] %vm367, %v370
        %v372 = vld [vmem:[#allocation4] sm:$0xff]
        %v373 = vadd.f32 %v372, %v309
        %374 = vst.msk [vmem:[#allocation4] sm:$0xff] %vm367, %v373
        // Predicated region
        $region33: #{tpu_custom_call.1} parent=27 // pred_check
          %p375 = pneg %p289
        $region34: #{tpu_custom_call.1} parent=27 // pred_check_branch
          %377 = sbr.rel (%p375) target = $region36
        $region35: #{tpu_custom_call.1} parent=27 // pred_region
          %v378 = vld [vmem:[#allocation2] sm:$0xff]
          %v379 = vsel %vm367, %v378, 0.0
          %380 = vadd.xlane.f32.xlu0 %v379
          %v381 = vpop.xlane.xlu0 %380
          %v382 = vrot.slane %v381, 4
          %v383 = vadd.f32 %v381, %v382
          %v384 = vrot.slane %v383, 2
          %v385 = vadd.f32 %v383, %v384
          %v386 = vrot.slane %v385, 1
          %v387 = vadd.f32 %v385, %v386
          %s388 = vtos %v387
          %v389 = vstv %s388
          %390 = vst [vmem:[%s256] sm:$0xff] %v389
          %v391 = vld [vmem:[#allocation3] sm:$0xff]
          %v392 = vsel %vm367, %v391, 0.0
          %393 = vadd.xlane.f32.xlu0 %v392
          %v394 = vpop.xlane.xlu0 %393
          %v395 = vrot.slane %v394, 4
          %v396 = vadd.f32 %v394, %v395
          %v397 = vrot.slane %v396, 2
          %v398 = vadd.f32 %v396, %v397
          %v399 = vrot.slane %v398, 1
          %v400 = vadd.f32 %v398, %v399
          %s401 = vtos %v400
          %v402 = vstv %s401
          %403 = vst [vmem:[%s263] sm:$0xff] %v402
          %v404 = vld [vmem:[#allocation4] sm:$0xff]
          %v405 = vsel %vm367, %v404, 0.0
          %406 = vadd.xlane.f32.xlu0 %v405
          %v407 = vpop.xlane.xlu0 %406
          %v408 = vrot.slane %v407, 4
          %v409 = vadd.f32 %v407, %v408
          %v410 = vrot.slane %v409, 2
          %v411 = vadd.f32 %v409, %v410
          %v412 = vrot.slane %v411, 1
          %v413 = vadd.f32 %v411, %v412
          %s414 = vtos %v413
          %v415 = vstv %s414
          %416 = vst [vmem:[%s270] sm:$0xff] %v415
        $region36: #{tpu_custom_call.1} parent=27 // pred_fallthru
          _
        %s417 = sand.u32 %s111, 1
        %s418 = scalar_lea.sflag [#allocation6], %s417
        %s419 = sand.u32 %s111, 1
        %s420 = smul.addr %s419, 8
        %s421 = scalar_lea.vmem [#allocation5], %s420
        %s422 = sand.u32 %s22, 1
        %s423 = scalar_lea.sflag [#allocation8], %s422
        %s424 = sand.u32 %s139, 1
        %s425 = smul.addr %s424, 8
        %s426 = scalar_lea.vmem [#allocation7], %s425
        %s427 = sand.u32 %s22, 1
        %s428 = scalar_lea.sflag [#allocation8], %s427
        %s429 = sand.u32 %s167, 1
        %s430 = smul.addr %s429, 8
        %s431 = scalar_lea.vmem [#allocation9], %s430
        // Predicated region
        $region37: #{tpu_custom_call.1} parent=27 // pred_check
          %p432 = pneg %p121
        $region38: #{tpu_custom_call.1} parent=27 // pred_check_branch
          %434 = sbr.rel (%p432) target = $region40
        $region39: #{tpu_custom_call.1} parent=27 // pred_region
          %s436 = ssub.s32 128, 128
          %437 = vsyncadd %s418, %s436
          %s438 = smul.addr %s27, 2
          %s439 = sadd.s32 %s28, %s438
          %s440 = smul.addr %s439, 128
          %s441 = scalar_lea.hbm %s2, %s440
          %s443 = sshll.u32 %s421, 4
          %s444 = int_to_ptr.vmem [resolvable:$true] %s443
          %446 = dma.vmem_to_hbm [thread:$0]  %s444, 128, %s441, %s418
        $region40: #{tpu_custom_call.1} parent=27 // pred_fallthru
          _
        // Predicated region
        $region41: #{tpu_custom_call.1} parent=27 // pred_check
          %p447 = pneg %p149
        $region42: #{tpu_custom_call.1} parent=27 // pred_check_branch
          %449 = sbr.rel (%p447) target = $region44
        $region43: #{tpu_custom_call.1} parent=27 // pred_region
          %s451 = ssub.s32 128, 128
          %452 = vsyncadd %s423, %s451
          %s453 = smul.addr %s27, 2
          %s454 = sadd.s32 %s28, %s453
          %s455 = smul.addr %s454, 128
          %s456 = scalar_lea.hbm %s3, %s455
          %s458 = sshll.u32 %s426, 4
          %s459 = int_to_ptr.vmem [resolvable:$true] %s458
          %461 = dma.vmem_to_hbm [thread:$0]  %s459, 128, %s456, %s423
        $region44: #{tpu_custom_call.1} parent=27 // pred_fallthru
          _
        // Predicated region
        $region45: #{tpu_custom_call.1} parent=27 // pred_check
          %p462 = pneg %p177
        $region46: #{tpu_custom_call.1} parent=27 // pred_check_branch
          %464 = sbr.rel (%p462) target = $region48
        $region47: #{tpu_custom_call.1} parent=27 // pred_region
          %s466 = ssub.s32 128, 128
          %467 = vsyncadd %s428, %s466
          %s468 = smul.addr %s27, 2
          %s469 = sadd.s32 %s28, %s468
          %s470 = smul.addr %s469, 128
          %s471 = scalar_lea.hbm %s4, %s470
          %s473 = sshll.u32 %s431, 4
          %s474 = int_to_ptr.vmem [resolvable:$true] %s473
          %476 = dma.vmem_to_hbm [thread:$0]  %s474, 128, %s471, %s428
        $region48: #{tpu_custom_call.1} parent=27 // pred_fallthru
          _
      $region28: #{tpu_custom_call.1} parent=5 // pred_fallthru
        _
      %p477 = scmp.le.s32.totalorder 2, %s17
      // Predicated region
      $region49: #{tpu_custom_call.1} parent=5 // pred_check
        %p478 = pneg %p477
      $region50: #{tpu_custom_call.1} parent=5 // pred_check_branch
        %480 = sbr.rel (%p478) target = $region52
      $region51: #{tpu_custom_call.1} parent=5 // pred_region
        %s481 = ssub.s32 %s17, 2
        // Predicated region
        $region53: #{tpu_custom_call.1} parent=51 // pred_check
          %p482 = pneg %p127
        $region54: #{tpu_custom_call.1} parent=51 // pred_check_branch
          %484 = sbr.rel (%p482) target = $region56
        $region55: #{tpu_custom_call.1} parent=51 // pred_region
          %s485 = sand.u32 %s112, 1
          %s486 = scalar_lea.sflag [#allocation6], %s485
          %s487 = sand.u32 %s112, 1
          %s488 = smul.addr %s487, 8
          %s489 = scalar_lea.vmem [#allocation5], %s488
          %490 = dma.done %s486, 128
        $region56: #{tpu_custom_call.1} parent=51 // pred_fallthru
          _
        // Predicated region
        $region57: #{tpu_custom_call.1} parent=51 // pred_check
          %p491 = pneg %p155
        $region58: #{tpu_custom_call.1} parent=51 // pred_check_branch
          %493 = sbr.rel (%p491) target = $region60
        $region59: #{tpu_custom_call.1} parent=51 // pred_region
          %s494 = sand.u32 %s23, 1
          %s495 = scalar_lea.sflag [#allocation8], %s494
          %s496 = sand.u32 %s140, 1
          %s497 = smul.addr %s496, 8
          %s498 = scalar_lea.vmem [#allocation7], %s497
          %499 = dma.done %s495, 128
        $region60: #{tpu_custom_call.1} parent=51 // pred_fallthru
          _
        // Predicated region
        $region61: #{tpu_custom_call.1} parent=51 // pred_check
          %p500 = pneg %p183
        $region62: #{tpu_custom_call.1} parent=51 // pred_check_branch
          %502 = sbr.rel (%p500) target = $region64
        $region63: #{tpu_custom_call.1} parent=51 // pred_region
          %s503 = sand.u32 %s23, 1
          %s504 = scalar_lea.sflag [#allocation8], %s503
          %s505 = sand.u32 %s168, 1
          %s506 = smul.addr %s505, 8
          %s507 = scalar_lea.vmem [#allocation9], %s506
          %508 = dma.done %s504, 128
        $region64: #{tpu_custom_call.1} parent=51 // pred_fallthru
          _
      $region52: #{tpu_custom_call.1} parent=5 // pred_fallthru
        _
    $region6: #{tpu_custom_call.1} parent=1 // loop_footer
      %s21 = sadd.s32 1, %s17
    $region7: #{tpu_custom_call.1} parent=1 // loop_footer_branch
      %16 = sbr.rel target = $region3
    $region8: #{tpu_custom_call.1} parent=1 // loop_exit
      _
    %509 = vsyncpa [#allocation6], 1
    %s510 = scalar_lea.sflag [#allocation6], 1
    %511 = vsyncpa %s510, 1
    %512 = vsyncpa [#allocation8], 1
    %s513 = scalar_lea.sflag [#allocation8], 1
    %514 = vsyncpa %s513, 1

</llo_original>
